<compile_context>
chip_gen: v7x
topology: tpu7x:2x2x1
jax: 0.10.0
libtpu: 0.0.40
codegen_flags: <defaults>
</compile_context>

<pallas_src>
import math

import jax
import jax.numpy as jnp
from jax.experimental import pallas as pl
from jax.experimental.pallas import tpu as pltpu


def actor_critic_kernel(
    sc_ref,      # (TB, I)   bf16 state, critic-flat layout (reshape(B, T*F))
    eps_ref,     # (TB, A)   f32 standard-normal noise for policy.sample()
    w1_ref,      # (I, 2H)   bf16 [actor.fc1 (row-permuted) | critic.fc1 state part]
    b1_ref,      # (1, 2H)   f32  [actor.fc1 bias | critic.fc1 bias]
    aw2_ref,     # (H, A)    bf16 actor.fc2 weight (x @ W layout)
    ab2_ref,     # (1, A)    f32
    std_ref,     # (1, A)    f32  exp(0.5 * policy_log_std)  (cov = diag(exp(log_std)))
    cw1a_ref,    # (A, H)    f32  critic.fc1 weight, action part (VPU path)
    cw2_ref,     # (H, H)    bf16 critic.fc2 weight
    cb2_ref,     # (1, H)    f32
    cw3_ref,     # (1, H)    f32  critic.q1 weight as a row vector
    consts_ref,  # (1, 2)    f32 in SMEM: [q1 bias, log_prob constant]
    out_ref,     # (TB, 2A+2) f32: [action | mean | log_prob | value]
):
    f32 = jnp.float32
    bf16 = jnp.bfloat16
    H = cw2_ref.shape[0]
    A = aw2_ref.shape[1]

    # ---- fused fc1: one bf16 MXU pass covers actor.fc1 + critic.fc1 (state part) --
    hq = jnp.dot(sc_ref[...], w1_ref[...], preferred_element_type=f32) + b1_ref[...]
    h_act = jnp.maximum(hq[:, :H], 0.0)   # actor hidden, post-ReLU
    q = hq[:, H:]                         # critic fc1 pre-activation (state part)

    # ---- actor head: fc2 -> softmax(dim=1)  (policy mean) -------------------------
    # Exact divide: the kernel is HBM-bound so the extra VPU/EUP work is hidden,
    # and it removes the approx-reciprocal error in probs flagged in review.
    logits = (jnp.dot(h_act.astype(bf16), aw2_ref[...], preferred_element_type=f32)
              + ab2_ref[...])
    m = jnp.max(logits, axis=1, keepdims=True)
    e = jnp.exp(logits - m)
    probs = e / jnp.sum(e, axis=1, keepdims=True)

    # ---- MultivariateNormal(probs, diag(exp(log_std))): sample + log_prob ---------
    # action = mean + eps*std  =>  (a-mu)^T Sigma^-1 (a-mu) == sum(eps^2).
    eps = eps_ref[...]
    action = probs + eps * std_ref[...]
    log_prob = -0.5 * jnp.sum(eps * eps, axis=1, keepdims=True) + consts_ref[0, 1]

    # ---- critic: cat(state, action) -> fc1 -> ReLU -> fc2 -> ReLU -> q1 -----------
    # The K=A(=4) action contraction is unrolled onto the VPU (broadcast FMAs),
    # keeping the MXU/MRF path free for the HxH fc2 matmul.
    for k in range(A):
        q = q + action[:, k:k + 1] * cw1a_ref[k:k + 1, :]
    q = jnp.maximum(q, 0.0)
    q = jnp.maximum(
        jnp.dot(q.astype(bf16), cw2_ref[...], preferred_element_type=f32)
        + cb2_ref[...], 0.0)
    # N=1 q1 matmul replaced by a VPU multiply + row reduction.
    value = jnp.sum(q * cw3_ref[...], axis=1, keepdims=True) + consts_ref[0, 0]

    # ---- single lane-contiguous packed output store --------------------------------
    # One store / one writeback DMA per block instead of four masked partial stores.
    out_ref[...] = jnp.concatenate([action, probs, log_prob, value], axis=1)


def _round_up(x, m):
    return -(-x // m) * m


def _batch_tiling(B, bytes_per_row):
    """Choose (block_b, grid_b, padded_B) for the batch ("parallel") grid axis.

    - Big blocks amortize the ~0.35us/grid-step pipeline overhead and give the
      DMA engine long contiguous transfers (small tiles sit far below the HBM
      roofline).
    - Double-buffered streaming blocks are kept under ~10 MiB so the kernel is
      safe under v5e's 16 MiB default scoped-VMEM limit and v7x's 64 MiB VMEM.
    - At least 2 blocks whenever B is large enough, so the "parallel" batch axis
      can shard across v7x's two TensorCores (costs nothing on v5e/v6e).
    """
    STREAM_BUDGET = 10 << 20                       # bytes for 2x-buffered in/out blocks
    cap = max(16, (STREAM_BUDGET // (2 * bytes_per_row)) // 16 * 16)
    n_blocks = max(2, -(-B // cap))                # >=2 target blocks
    block_b = max(16, min(_round_up(-(-B // n_blocks), 16), cap))
    grid_b = -(-B // block_b)
    return block_b, grid_b, grid_b * block_b


def actor_critic_forward(state, packed, eps):
    """state: (B, T, F).  Returns (action, log_prob, value, mean)."""
    B, T, F = state.shape
    I = T * F
    H = packed["cw2"].shape[0]
    A = packed["aw2"].shape[1]
    OUT_W = 2 * A + 2

    # Only one flattened view is needed; the actor permutation is baked into w1.
    # bf16 state stream: the state slab dominates HBM traffic and the MXU is
    # bf16-native.  (No-op if the caller already holds the state in bf16.)
    sc = state.reshape(B, I).astype(jnp.bfloat16)
    eps = eps.astype(jnp.float32)

    bytes_per_row = I * 2 + A * 4 + OUT_W * 4      # sc(bf16) + eps(f32) + out(f32)
    block_b, grid_b, b_pad = _batch_tiling(B, bytes_per_row)
    if b_pad != B:
        # Padded (zero) tail rows are computed and sliced off below -- they never
        # reach the caller.
        sc = jnp.pad(sc, ((0, b_pad - B), (0, 0)))
        eps = jnp.pad(eps, ((0, b_pad - B), (0, 0)))

    def batched(width):
        return pl.BlockSpec((block_b, width), lambda i: (i, 0))

    def resident(shape):
        # Constant index_map: fetched once, stays VMEM-resident across the grid.
        # (If I/H are scaled up, add pipeline_mode=pl.Buffered(1) here to
        # single-buffer these constant blocks and halve resident-weight VMEM,
        # which matters most on v7x's 64 MiB VMEM.)
        return pl.BlockSpec(shape, lambda i: tuple(0 for _ in shape))

    smem = pl.BlockSpec(memory_space=pltpu.MemorySpace.SMEM)

    out = pl.pallas_call(
        actor_critic_kernel,
        out_shape=jax.ShapeDtypeStruct((b_pad, OUT_W), jnp.float32),
        grid=(grid_b,),
        in_specs=[
            batched(I),                         # sc
            batched(A),                         # eps
            resident(packed["w1"].shape),       # (I, 2H) bf16
            resident(packed["b1"].shape),       # (1, 2H)
            resident(packed["aw2"].shape),      # (H, A) bf16
            resident(packed["ab2"].shape),      # (1, A)
            resident(packed["std"].shape),      # (1, A)
            resident(packed["cw1a"].shape),     # (A, H)
            resident(packed["cw2"].shape),      # (H, H) bf16
            resident(packed["cb2"].shape),      # (1, H)
            resident(packed["cw3_row"].shape),  # (1, H)
            smem,                               # consts (1, 2)
        ],
        out_specs=batched(OUT_W),
        compiler_params=pltpu.CompilerParams(
            dimension_semantics=("parallel",),
            # Explicit scoped-VMEM limit: v5e's default is only 16 MiB; 32 MiB is
            # comfortably within physical VMEM on v5e/v6e (128 MiB) and v7x (64 MiB).
            vmem_limit_bytes=32 << 20),
    )(sc, eps, packed["w1"], packed["b1"], packed["aw2"], packed["ab2"],
      packed["std"], packed["cw1a"], packed["cw2"], packed["cb2"],
      packed["cw3_row"], packed["consts"])

    out = out[:B]
    action = out[:, :A]
    mean = out[:, A:2 * A]
    log_prob = out[:, 2 * A]
    value = out[:, 2 * A + 1:2 * A + 2]
    return action, log_prob, value, mean


def init_params(key, input_size, hidden_size, action_size):
    """PyTorch-style synthetic init (uniform +-1/sqrt(fan_in)), x @ W layout."""
    ks = jax.random.split(key, 10)

    def lin(kw, kb, fan_in, fan_out):
        bound = 1.0 / math.sqrt(fan_in)
        w = jax.random.uniform(kw, (fan_in, fan_out), jnp.float32, -bound, bound)
        b = jax.random.uniform(kb, (1, fan_out), jnp.float32, -bound, bound)
        return w, b

    aw1, ab1 = lin(ks[0], ks[1], input_size, hidden_size)
    aw2, ab2 = lin(ks[2], ks[3], hidden_size, action_size)
    # critic.fc1 operates on cat([state, action]) — split its weight in two.
    cw1, cb1 = lin(ks[4], ks[5], input_size + action_size, hidden_size)
    cw1s, cw1a = cw1[:input_size, :], cw1[input_size:, :]
    cw2, cb2 = lin(ks[6], ks[7], hidden_size, hidden_size)
    cw3, cb3 = lin(ks[8], ks[9], hidden_size, 1)
    logstd = jnp.zeros((1, action_size), jnp.float32)  # nn.Parameter(torch.zeros(A))

    return dict(aw1=aw1, ab1=ab1, aw2=aw2, ab2=ab2, logstd=logstd,
                cw1s=cw1s, cw1a=cw1a, cb1=cb1, cw2=cw2, cb2=cb2,
                cw3=cw3, cb3=cb3)


def pack_params(raw, T, F):
    """One-time weight preprocessing (done at init time, not per call)."""
    I, H = raw["aw1"].shape
    A = raw["aw2"].shape[1]
    # Actor flatten: sa[b, f*T + t] == state[b, t, f] == sc[b, t*F + f]
    # => permute aw1 rows so it consumes the plain-reshape (critic-flat) layout.
    aw1_perm = raw["aw1"].reshape(F, T, H).transpose(1, 0, 2).reshape(I, H)
    w1 = jnp.concatenate([aw1_perm, raw["cw1s"]], axis=1)        # (I, 2H)
    b1 = jnp.concatenate([raw["ab1"], raw["cb1"]], axis=1)       # (1, 2H)
    std = jnp.exp(0.5 * raw["logstd"])                           # (1, A)
    lp_const = -0.5 * (A * math.log(2.0 * math.pi) + jnp.sum(raw["logstd"]))
    consts = jnp.concatenate(
        [raw["cb3"].reshape(1, 1), jnp.reshape(lp_const, (1, 1))],
        axis=1).astype(jnp.float32)                              # (1, 2)
    # Matmul weights in bf16 (MXU-native, halves resident/streamed weight bytes);
    # biases / std / the tiny VPU-path weights stay f32.
    return dict(w1=w1.astype(jnp.bfloat16), b1=b1,
                aw2=raw["aw2"].astype(jnp.bfloat16), ab2=raw["ab2"], std=std,
                cw1a=raw["cw1a"],
                cw2=raw["cw2"].astype(jnp.bfloat16), cb2=raw["cb2"],
                cw3_row=raw["cw3"].reshape(1, H), consts=consts)


def reference_forward(state, raw, eps):
    """Pure-JAX (f32) transcription of the PyTorch ActorCritic.forward."""
    B, T, F = state.shape
    sa = jnp.transpose(state, (0, 2, 1)).reshape(B, F * T)
    sc = state.reshape(B, T * F)
    h = jnp.maximum(sa @ raw["aw1"] + raw["ab1"], 0.0)
    probs = jax.nn.softmax(h @ raw["aw2"] + raw["ab2"], axis=1)
    var = jnp.exp(raw["logstd"])
    std = jnp.exp(0.5 * raw["logstd"])
    action = probs + eps * std
    A = action.shape[-1]
    diff = action - probs
    log_prob = -0.5 * (jnp.sum(diff * diff / var, axis=1)
                       + A * math.log(2.0 * math.pi)
                       + jnp.sum(raw["logstd"]))
    q = jnp.maximum(sc @ raw["cw1s"] + action @ raw["cw1a"] + raw["cb1"], 0.0)
    q = jnp.maximum(q @ raw["cw2"] + raw["cb2"], 0.0)
    value = q @ raw["cw3"] + raw["cb3"]
    return action, log_prob, value, probs


if __name__ == "__main__":
    # small shapes: batch=2, seq(T)=8, features(F)=4 -> input_size = 32
    B, T, F = 2, 8, 4
    input_size = T * F
    hidden_size = 32
    action_size = 4

    key = jax.random.PRNGKey(0)
    k_state, k_eps, k_params = jax.random.split(key, 3)

    state = jax.random.normal(k_state, (B, T, F), jnp.float32)
    eps = jax.random.normal(k_eps, (B, action_size), jnp.float32)

    raw = init_params(k_params, input_size, hidden_size, action_size)
    packed = pack_params(raw, T, F)

    action, log_prob, value, mean = actor_critic_forward(state, packed, eps)
    jax.block_until_ready((action, log_prob, value, mean))

    assert action.shape == (B, action_size)
    assert log_prob.shape == (B,)
    assert value.shape == (B, 1)
    assert mean.shape == (B, action_size)

    # Self-check against the pure-f32 JAX reference.  Tolerance reflects the
    # bf16 state/weight streaming (f32 accumulation) used for performance.
    ra, rlp, rv, rm = reference_forward(state, raw, eps)
    assert jnp.allclose(action, ra, atol=3e-2, rtol=3e-2)
    assert jnp.allclose(mean, rm, atol=3e-2, rtol=3e-2)
    assert jnp.allclose(log_prob, rlp, atol=3e-2, rtol=3e-2)
    assert jnp.allclose(value, rv, atol=3e-2, rtol=3e-2)

    print("KERNEL_OK")
</pallas_src>

<mosaic_0001>
module attributes {stable_mosaic.version = 11 : i64} {
  func.func @actor_critic_kernel(%arg0: i32, %arg1: memref<16x32xbf16, #tpu.memory_space<vmem>>, %arg2: memref<16x4xf32, #tpu.memory_space<vmem>>, %arg3: memref<32x64xbf16, #tpu.memory_space<vmem>>, %arg4: memref<1x64xf32, #tpu.memory_space<vmem>>, %arg5: memref<32x4xbf16, #tpu.memory_space<vmem>>, %arg6: memref<1x4xf32, #tpu.memory_space<vmem>>, %arg7: memref<1x4xf32, #tpu.memory_space<vmem>>, %arg8: memref<4x32xf32, #tpu.memory_space<vmem>>, %arg9: memref<32x32xbf16, #tpu.memory_space<vmem>>, %arg10: memref<1x32xf32, #tpu.memory_space<vmem>>, %arg11: memref<1x32xf32, #tpu.memory_space<vmem>>, %arg12: memref<1x2xf32, #tpu.memory_space<smem>>, %arg13: memref<16x10xf32, #tpu.memory_space<vmem>>) attributes {dimension_semantics = [#tpu.dimension_semantics<parallel>], iteration_bounds = array<i64: 1>, scalar_prefetch = 0 : i64, scratch_operands = 0 : i64, tpu.core_type = #tpu.core_type<tc>, window_params = [{transform_indices = @transform_0, window_bounds = array<i64: 16, 32>}, {transform_indices = @transform_1, window_bounds = array<i64: 16, 4>}, {pipeline_mode = #tpu.pipeline_mode<synchronous>, transform_indices = @transform_2, window_bounds = array<i64: 32, 64>}, {pipeline_mode = #tpu.pipeline_mode<synchronous>, transform_indices = @transform_3, window_bounds = array<i64: 1, 64>}, {pipeline_mode = #tpu.pipeline_mode<synchronous>, transform_indices = @transform_4, window_bounds = array<i64: 32, 4>}, {pipeline_mode = #tpu.pipeline_mode<synchronous>, transform_indices = @transform_5, window_bounds = array<i64: 1, 4>}, {pipeline_mode = #tpu.pipeline_mode<synchronous>, transform_indices = @transform_6, window_bounds = array<i64: 1, 4>}, {pipeline_mode = #tpu.pipeline_mode<synchronous>, transform_indices = @transform_7, window_bounds = array<i64: 4, 32>}, {pipeline_mode = #tpu.pipeline_mode<synchronous>, transform_indices = @transform_8, window_bounds = array<i64: 32, 32>}, {pipeline_mode = #tpu.pipeline_mode<synchronous>, transform_indices = @transform_9, window_bounds = array<i64: 1, 32>}, {pipeline_mode = #tpu.pipeline_mode<synchronous>, transform_indices = @transform_10, window_bounds = array<i64: 1, 32>}, {transform_indices = @transform_11, window_bounds = array<i64: 1, 2>}, {transform_indices = @transform_12, window_bounds = array<i64: 16, 10>}]} {
    %c0 = arith.constant 0 : index
    %c0_0 = arith.constant 0 : index
    %0 = vector.load %arg1[%c0, %c0_0] : memref<16x32xbf16, #tpu.memory_space<vmem>>, vector<16x32xbf16>
    %c0_1 = arith.constant 0 : index
    %c0_2 = arith.constant 0 : index
    %1 = vector.load %arg3[%c0_1, %c0_2] : memref<32x64xbf16, #tpu.memory_space<vmem>>, vector<32x64xbf16>
    %cst = arith.constant dense<0.000000e+00> : vector<16x64xf32>
    %2 = tpu.matmul %0, %1, %cst {dimension_numbers = #tpu.dot_dimension_numbers<[1], [0], [0], [1], [0, 0, 1, 1], [], []>} : vector<16x32xbf16>, vector<32x64xbf16>, vector<16x64xf32> -> vector<16x64xf32>
    %c0_3 = arith.constant 0 : index
    %c0_4 = arith.constant 0 : index
    %3 = vector.load %arg4[%c0_3, %c0_4] : memref<1x64xf32, #tpu.memory_space<vmem>>, vector<1x64xf32>
    %4 = vector.broadcast %3 : vector<1x64xf32> to vector<16x64xf32>
    %5 = arith.addf %2, %4 : vector<16x64xf32>
    %6 = vector.extract_strided_slice %5 {offsets = [0, 0], sizes = [16, 32], strides = [1, 1]} : vector<16x64xf32> to vector<16x32xf32>
    %cst_5 = arith.constant 0.000000e+00 : f32
    %7 = vector.broadcast %cst_5 : f32 to vector<16x32xf32>
    %8 = arith.maximumf %6, %7 : vector<16x32xf32>
    %9 = vector.extract_strided_slice %5 {offsets = [0, 32], sizes = [16, 32], strides = [1, 1]} : vector<16x64xf32> to vector<16x32xf32>
    %10 = arith.truncf %8 : vector<16x32xf32> to vector<16x32xbf16>
    %c0_6 = arith.constant 0 : index
    %c0_7 = arith.constant 0 : index
    %11 = vector.load %arg5[%c0_6, %c0_7] : memref<32x4xbf16, #tpu.memory_space<vmem>>, vector<32x4xbf16>
    %cst_8 = arith.constant dense<0.000000e+00> : vector<16x4xf32>
    %12 = tpu.matmul %10, %11, %cst_8 {dimension_numbers = #tpu.dot_dimension_numbers<[1], [0], [0], [1], [0, 0, 1, 1], [], []>} : vector<16x32xbf16>, vector<32x4xbf16>, vector<16x4xf32> -> vector<16x4xf32>
    %c0_9 = arith.constant 0 : index
    %c0_10 = arith.constant 0 : index
    %13 = vector.load %arg6[%c0_9, %c0_10] : memref<1x4xf32, #tpu.memory_space<vmem>>, vector<1x4xf32>
    %14 = vector.broadcast %13 : vector<1x4xf32> to vector<16x4xf32>
    %15 = arith.addf %12, %14 : vector<16x4xf32>
    %cst_11 = arith.constant dense<0xFF800000> : vector<16xf32>
    %16 = vector.multi_reduction <maximumf>, %15, %cst_11 [1] : vector<16x4xf32> to vector<16xf32>
    %17 = vector.shape_cast %16 : vector<16xf32> to vector<16x1xf32>
    %18 = vector.broadcast %17 : vector<16x1xf32> to vector<16x4xf32>
    %19 = arith.subf %15, %18 : vector<16x4xf32>
    %20 = math.exp %19 : vector<16x4xf32>
    %cst_12 = arith.constant dense<0.000000e+00> : vector<16xf32>
    %21 = vector.multi_reduction <add>, %20, %cst_12 [1] : vector<16x4xf32> to vector<16xf32>
    %22 = vector.shape_cast %21 : vector<16xf32> to vector<16x1xf32>
    %23 = vector.broadcast %22 : vector<16x1xf32> to vector<16x4xf32>
    %24 = arith.divf %20, %23 : vector<16x4xf32>
    %c0_13 = arith.constant 0 : index
    %c0_14 = arith.constant 0 : index
    %25 = vector.load %arg2[%c0_13, %c0_14] : memref<16x4xf32, #tpu.memory_space<vmem>>, vector<16x4xf32>
    %c0_15 = arith.constant 0 : index
    %c0_16 = arith.constant 0 : index
    %26 = vector.load %arg7[%c0_15, %c0_16] : memref<1x4xf32, #tpu.memory_space<vmem>>, vector<1x4xf32>
    %27 = vector.broadcast %26 : vector<1x4xf32> to vector<16x4xf32>
    %28 = arith.mulf %25, %27 : vector<16x4xf32>
    %29 = arith.addf %24, %28 : vector<16x4xf32>
    %30 = arith.mulf %25, %25 : vector<16x4xf32>
    %cst_17 = arith.constant dense<0.000000e+00> : vector<16xf32>
    %31 = vector.multi_reduction <add>, %30, %cst_17 [1] : vector<16x4xf32> to vector<16xf32>
    %32 = vector.shape_cast %31 : vector<16xf32> to vector<16x1xf32>
    %cst_18 = arith.constant -5.000000e-01 : f32
    %33 = vector.broadcast %cst_18 : f32 to vector<16x1xf32>
    %34 = arith.mulf %33, %32 : vector<16x1xf32>
    %c0_19 = arith.constant 0 : index
    %c1 = arith.constant 1 : index
    %35 = memref.load %arg12[%c0_19, %c1] : memref<1x2xf32, #tpu.memory_space<smem>>
    %36 = vector.broadcast %35 : f32 to vector<16x1xf32>
    %37 = arith.addf %34, %36 : vector<16x1xf32>
    %38 = vector.extract_strided_slice %29 {offsets = [0, 0], sizes = [16, 1], strides = [1, 1]} : vector<16x4xf32> to vector<16x1xf32>
    %c0_20 = arith.constant 0 : index
    %c0_21 = arith.constant 0 : index
    %39 = vector.load %arg8[%c0_20, %c0_21] : memref<4x32xf32, #tpu.memory_space<vmem>>, vector<1x32xf32>
    %40 = vector.broadcast %38 : vector<16x1xf32> to vector<16x32xf32>
    %41 = vector.broadcast %39 : vector<1x32xf32> to vector<16x32xf32>
    %42 = arith.mulf %40, %41 : vector<16x32xf32>
    %43 = arith.addf %9, %42 : vector<16x32xf32>
    %44 = vector.extract_strided_slice %29 {offsets = [0, 1], sizes = [16, 1], strides = [1, 1]} : vector<16x4xf32> to vector<16x1xf32>
    %c1_22 = arith.constant 1 : index
    %c0_23 = arith.constant 0 : index
    %45 = vector.load %arg8[%c1_22, %c0_23] : memref<4x32xf32, #tpu.memory_space<vmem>>, vector<1x32xf32>
    %46 = vector.broadcast %44 : vector<16x1xf32> to vector<16x32xf32>
    %47 = vector.broadcast %45 : vector<1x32xf32> to vector<16x32xf32>
    %48 = arith.mulf %46, %47 : vector<16x32xf32>
    %49 = arith.addf %43, %48 : vector<16x32xf32>
    %50 = vector.extract_strided_slice %29 {offsets = [0, 2], sizes = [16, 1], strides = [1, 1]} : vector<16x4xf32> to vector<16x1xf32>
    %c2 = arith.constant 2 : index
    %c0_24 = arith.constant 0 : index
    %51 = vector.load %arg8[%c2, %c0_24] : memref<4x32xf32, #tpu.memory_space<vmem>>, vector<1x32xf32>
    %52 = vector.broadcast %50 : vector<16x1xf32> to vector<16x32xf32>
    %53 = vector.broadcast %51 : vector<1x32xf32> to vector<16x32xf32>
    %54 = arith.mulf %52, %53 : vector<16x32xf32>
    %55 = arith.addf %49, %54 : vector<16x32xf32>
    %56 = vector.extract_strided_slice %29 {offsets = [0, 3], sizes = [16, 1], strides = [1, 1]} : vector<16x4xf32> to vector<16x1xf32>
    %c3 = arith.constant 3 : index
    %c0_25 = arith.constant 0 : index
    %57 = vector.load %arg8[%c3, %c0_25] : memref<4x32xf32, #tpu.memory_space<vmem>>, vector<1x32xf32>
    %58 = vector.broadcast %56 : vector<16x1xf32> to vector<16x32xf32>
    %59 = vector.broadcast %57 : vector<1x32xf32> to vector<16x32xf32>
    %60 = arith.mulf %58, %59 : vector<16x32xf32>
    %61 = arith.addf %55, %60 : vector<16x32xf32>
    %cst_26 = arith.constant 0.000000e+00 : f32
    %62 = vector.broadcast %cst_26 : f32 to vector<16x32xf32>
    %63 = arith.maximumf %61, %62 : vector<16x32xf32>
    %64 = arith.truncf %63 : vector<16x32xf32> to vector<16x32xbf16>
    %c0_27 = arith.constant 0 : index
    %c0_28 = arith.constant 0 : index
    %65 = vector.load %arg9[%c0_27, %c0_28] : memref<32x32xbf16, #tpu.memory_space<vmem>>, vector<32x32xbf16>
    %cst_29 = arith.constant dense<0.000000e+00> : vector<16x32xf32>
    %66 = tpu.matmul %64, %65, %cst_29 {dimension_numbers = #tpu.dot_dimension_numbers<[1], [0], [0], [1], [0, 0, 1, 1], [], []>} : vector<16x32xbf16>, vector<32x32xbf16>, vector<16x32xf32> -> vector<16x32xf32>
    %c0_30 = arith.constant 0 : index
    %c0_31 = arith.constant 0 : index
    %67 = vector.load %arg10[%c0_30, %c0_31] : memref<1x32xf32, #tpu.memory_space<vmem>>, vector<1x32xf32>
    %68 = vector.broadcast %67 : vector<1x32xf32> to vector<16x32xf32>
    %69 = arith.addf %66, %68 : vector<16x32xf32>
    %cst_32 = arith.constant 0.000000e+00 : f32
    %70 = vector.broadcast %cst_32 : f32 to vector<16x32xf32>
    %71 = arith.maximumf %69, %70 : vector<16x32xf32>
    %c0_33 = arith.constant 0 : index
    %c0_34 = arith.constant 0 : index
    %72 = vector.load %arg11[%c0_33, %c0_34] : memref<1x32xf32, #tpu.memory_space<vmem>>, vector<1x32xf32>
    %73 = vector.broadcast %72 : vector<1x32xf32> to vector<16x32xf32>
    %74 = arith.mulf %71, %73 : vector<16x32xf32>
    %cst_35 = arith.constant dense<0.000000e+00> : vector<16xf32>
    %75 = vector.multi_reduction <add>, %74, %cst_35 [1] : vector<16x32xf32> to vector<16xf32>
    %76 = vector.shape_cast %75 : vector<16xf32> to vector<16x1xf32>
    %c0_36 = arith.constant 0 : index
    %c0_37 = arith.constant 0 : index
    %77 = memref.load %arg12[%c0_36, %c0_37] : memref<1x2xf32, #tpu.memory_space<smem>>
    %78 = vector.broadcast %77 : f32 to vector<16x1xf32>
    %79 = arith.addf %76, %78 : vector<16x1xf32>
    %80 = tpu.concatenate %29, %24, %37, %79 in 1 : vector<16x4xf32>, vector<16x4xf32>, vector<16x1xf32>, vector<16x1xf32> -> vector<16x10xf32>
    %c0_38 = arith.constant 0 : index
    %c0_39 = arith.constant 0 : index
    %81 = vector.load %arg13[%c0_38, %c0_39] : memref<16x10xf32, #tpu.memory_space<vmem>>, vector<16x10xf32>
    tpu.vector_store %arg13[%c0_38, %c0_39], %80 {strides = array<i32>} : memref<16x10xf32, #tpu.memory_space<vmem>>, vector<16x10xf32>,
    return
  }
  func.func @transform_0(%arg0: i32) -> (i32, i32) {
    %c0_i32 = arith.constant 0 : i32
    %c0_i32_0 = arith.constant 0 : i32
    return %arg0, %c0_i32 : i32, i32
  }
  func.func @transform_1(%arg0: i32) -> (i32, i32) {
    %c0_i32 = arith.constant 0 : i32
    %c0_i32_0 = arith.constant 0 : i32
    return %arg0, %c0_i32 : i32, i32
  }
  func.func @transform_2(%arg0: i32) -> (i32, i32) {
    %c0_i32 = arith.constant 0 : i32
    %c0_i32_0 = arith.constant 0 : i32
    %c0_i32_1 = arith.constant 0 : i32
    return %c0_i32, %c0_i32_0 : i32, i32
  }
  func.func @transform_3(%arg0: i32) -> (i32, i32) {
    %c0_i32 = arith.constant 0 : i32
    %c0_i32_0 = arith.constant 0 : i32
    %c0_i32_1 = arith.constant 0 : i32
    return %c0_i32, %c0_i32_0 : i32, i32
  }
  func.func @transform_4(%arg0: i32) -> (i32, i32) {
    %c0_i32 = arith.constant 0 : i32
    %c0_i32_0 = arith.constant 0 : i32
    %c0_i32_1 = arith.constant 0 : i32
    return %c0_i32, %c0_i32_0 : i32, i32
  }
  func.func @transform_5(%arg0: i32) -> (i32, i32) {
    %c0_i32 = arith.constant 0 : i32
    %c0_i32_0 = arith.constant 0 : i32
    %c0_i32_1 = arith.constant 0 : i32
    return %c0_i32, %c0_i32_0 : i32, i32
  }
  func.func @transform_6(%arg0: i32) -> (i32, i32) {
    %c0_i32 = arith.constant 0 : i32
    %c0_i32_0 = arith.constant 0 : i32
    %c0_i32_1 = arith.constant 0 : i32
    return %c0_i32, %c0_i32_0 : i32, i32
  }
  func.func @transform_7(%arg0: i32) -> (i32, i32) {
    %c0_i32 = arith.constant 0 : i32
    %c0_i32_0 = arith.constant 0 : i32
    %c0_i32_1 = arith.constant 0 : i32
    return %c0_i32, %c0_i32_0 : i32, i32
  }
  func.func @transform_8(%arg0: i32) -> (i32, i32) {
    %c0_i32 = arith.constant 0 : i32
    %c0_i32_0 = arith.constant 0 : i32
    %c0_i32_1 = arith.constant 0 : i32
    return %c0_i32, %c0_i32_0 : i32, i32
  }
  func.func @transform_9(%arg0: i32) -> (i32, i32) {
    %c0_i32 = arith.constant 0 : i32
    %c0_i32_0 = arith.constant 0 : i32
    %c0_i32_1 = arith.constant 0 : i32
    return %c0_i32, %c0_i32_0 : i32, i32
  }
  func.func @transform_10(%arg0: i32) -> (i32, i32) {
    %c0_i32 = arith.constant 0 : i32
    %c0_i32_0 = arith.constant 0 : i32
    %c0_i32_1 = arith.constant 0 : i32
    return %c0_i32, %c0_i32_0 : i32, i32
  }
  func.func @transform_11(%arg0: i32) -> (i32, i32) {
    %c0_i32 = arith.constant 0 : i32
    %c0_i32_0 = arith.constant 0 : i32
    %c0_i32_1 = arith.constant 0 : i32
    return %c0_i32, %c0_i32_0 : i32, i32
  }
  func.func @transform_12(%arg0: i32) -> (i32, i32) {
    %c0_i32 = arith.constant 0 : i32
    %c0_i32_0 = arith.constant 0 : i32
    return %arg0, %c0_i32 : i32, i32
  }
}

</mosaic_0001>

<llo_original>
// kernel: tpu_custom_call.1
$region0: #{tpu_custom_call.1}
  #allocation0 [shape = 'u32[]', space=smem, size = 0x4, offset = 0x4, fixed_abs, tag = 'smem constant byte address 0x4 - core index']
  #allocation1 [shape = 'u32[144,128]{1,0:T(1,128)}', space=vmem, size = 0x12000, scoped, tag = 'internal scratch']
  %s0 = inlined_call_operand.hbm [shape: bf16[16,32], index: 0, kind: input, shape index: {}]
  %s1 = inlined_call_operand.vmem [shape: f32[16,4], index: 1, kind: input, shape index: {}]
  %s2 = inlined_call_operand.vmem [shape: bf16[32,64], index: 2, kind: input, shape index: {}]
  %s3 = inlined_call_operand.vmem [shape: f32[1,64], index: 3, kind: input, shape index: {}]
  %s4 = inlined_call_operand.vmem [shape: bf16[32,4], index: 4, kind: input, shape index: {}]
  %s5 = inlined_call_operand.vmem [shape: f32[1,4], index: 5, kind: input, shape index: {}]
  %s6 = inlined_call_operand.vmem [shape: f32[1,4], index: 6, kind: input, shape index: {}]
  %s7 = inlined_call_operand.vmem [shape: f32[4,32], index: 7, kind: input, shape index: {}]
  %s8 = inlined_call_operand.vmem [shape: bf16[32,32], index: 8, kind: input, shape index: {}]
  %s9 = inlined_call_operand.vmem [shape: f32[1,32], index: 9, kind: input, shape index: {}]
  %s10 = inlined_call_operand.vmem [shape: f32[1,32], index: 10, kind: input, shape index: {}]
  %s11 = inlined_call_operand.vmem [shape: f32[1,2], index: 11, kind: input, shape index: {}]
  %s12 = inlined_call_operand.hbm [shape: f32[16,10], index: 12, kind: output, shape index: {}]
  %s13 = sld [smem:[#allocation0]]
  $region66: #{tpu_custom_call.1} parent=0
    _
  %s15 = ssub.s32 1, %s13
  %s16 = scalar_select 0, %s15, %s13
  $region1: #{tpu_custom_call.1} parent=0
    #allocation2 [shape = 'u8[4096]{0}', space=vmem, size = 0x1000, scoped, tag = 'input window, operand 0, single buffered']
    #allocation3 [shape = 's32[1]{0}', space=sflag, size = 0x4, scoped, tag = 'scoped memory for tpu_custom_call.1']
    #allocation4 [shape = 's32[1]{0}', space=sflag, size = 0x4, scoped, tag = 'scoped memory for tpu_custom_call.1']
    #allocation5 [shape = 's32[1]{0}', space=sflag, size = 0x4, scoped, tag = 'scoped memory for tpu_custom_call.1']
    #allocation6 [shape = 'u8[512]{0}', space=smem, size = 0x200, scoped, tag = 'input window, operand 11, single buffered']
    #allocation7 [shape = 'u8[8192]{0}', space=vmem, size = 0x2000, scoped, tag = 'output window, operand 0, single buffered']
    %17 = vsyncpa [#allocation3], 0
    %18 = vsyncpa [#allocation5], 0
    %19 = vsyncpa [#allocation4], 0
    // Predicated region
    $region2: #{tpu_custom_call.1} parent=1 // pred_check
      _
    $region3: #{tpu_custom_call.1} parent=1 // pred_check_branch
      %21 = sbr.rel (0) target = $region5
    $region4: #{tpu_custom_call.1} parent=1 // pred_region
      %s23 = ssub.s32 128, 128
      %24 = vsyncadd [#allocation3], %s23
      %s25 = sshll.u32 [#allocation2], 4
      %s26 = int_to_ptr.vmem [resolvable:$true] %s25
      %31 = dma.hbm_to_vmem [thread:$0]  %s0, 128, %s26, [#allocation3], 64, 64, 4
    $region5: #{tpu_custom_call.1} parent=1 // pred_fallthru
      _
    // Predicated region
    $region6: #{tpu_custom_call.1} parent=1 // pred_check
      _
    $region7: #{tpu_custom_call.1} parent=1 // pred_check_branch
      %33 = sbr.rel (0) target = $region9
    $region8: #{tpu_custom_call.1} parent=1 // pred_region
      _
    $region9: #{tpu_custom_call.1} parent=1 // pred_fallthru
      _
    // Predicated region
    $region10: #{tpu_custom_call.1} parent=1 // pred_check
      _
    $region11: #{tpu_custom_call.1} parent=1 // pred_check_branch
      %35 = sbr.rel (0) target = $region13
    $region12: #{tpu_custom_call.1} parent=1 // pred_region
      _
    $region13: #{tpu_custom_call.1} parent=1 // pred_fallthru
      _
    // Predicated region
    $region14: #{tpu_custom_call.1} parent=1 // pred_check
      _
    $region15: #{tpu_custom_call.1} parent=1 // pred_check_branch
      %37 = sbr.rel (0) target = $region17
    $region16: #{tpu_custom_call.1} parent=1 // pred_region
      _
    $region17: #{tpu_custom_call.1} parent=1 // pred_fallthru
      _
    // Predicated region
    $region18: #{tpu_custom_call.1} parent=1 // pred_check
      _
    $region19: #{tpu_custom_call.1} parent=1 // pred_check_branch
      %39 = sbr.rel (0) target = $region21
    $region20: #{tpu_custom_call.1} parent=1 // pred_region
      _
    $region21: #{tpu_custom_call.1} parent=1 // pred_fallthru
      _
    // Predicated region
    $region22: #{tpu_custom_call.1} parent=1 // pred_check
      _
    $region23: #{tpu_custom_call.1} parent=1 // pred_check_branch
      %41 = sbr.rel (0) target = $region25
    $region24: #{tpu_custom_call.1} parent=1 // pred_region
      _
    $region25: #{tpu_custom_call.1} parent=1 // pred_fallthru
      _
    // Predicated region
    $region26: #{tpu_custom_call.1} parent=1 // pred_check
      _
    $region27: #{tpu_custom_call.1} parent=1 // pred_check_branch
      %43 = sbr.rel (0) target = $region29
    $region28: #{tpu_custom_call.1} parent=1 // pred_region
      _
    $region29: #{tpu_custom_call.1} parent=1 // pred_fallthru
      _
    // Predicated region
    $region30: #{tpu_custom_call.1} parent=1 // pred_check
      _
    $region31: #{tpu_custom_call.1} parent=1 // pred_check_branch
      %45 = sbr.rel (0) target = $region33
    $region32: #{tpu_custom_call.1} parent=1 // pred_region
      _
    $region33: #{tpu_custom_call.1} parent=1 // pred_fallthru
      _
    // Predicated region
    $region34: #{tpu_custom_call.1} parent=1 // pred_check
      _
    $region35: #{tpu_custom_call.1} parent=1 // pred_check_branch
      %47 = sbr.rel (0) target = $region37
    $region36: #{tpu_custom_call.1} parent=1 // pred_region
      _
    $region37: #{tpu_custom_call.1} parent=1 // pred_fallthru
      _
    // Predicated region
    $region38: #{tpu_custom_call.1} parent=1 // pred_check
      _
    $region39: #{tpu_custom_call.1} parent=1 // pred_check_branch
      %49 = sbr.rel (0) target = $region41
    $region40: #{tpu_custom_call.1} parent=1 // pred_region
      _
    $region41: #{tpu_custom_call.1} parent=1 // pred_fallthru
      _
    // Predicated region
    $region42: #{tpu_custom_call.1} parent=1 // pred_check
      _
    $region43: #{tpu_custom_call.1} parent=1 // pred_check_branch
      %51 = sbr.rel (0) target = $region45
    $region44: #{tpu_custom_call.1} parent=1 // pred_region
      _
    $region45: #{tpu_custom_call.1} parent=1 // pred_fallthru
      _
    // Predicated region
    $region46: #{tpu_custom_call.1} parent=1 // pred_check
      _
    $region47: #{tpu_custom_call.1} parent=1 // pred_check_branch
      %53 = sbr.rel (0) target = $region49
    $region48: #{tpu_custom_call.1} parent=1 // pred_region
      %s55 = ssub.s32 16, 16
      %56 = vsyncadd [#allocation5], %s55
      %s58 = sshll.u32 %s11, 4
      %s59 = int_to_ptr.vmem [resolvable:$true] %s58
      %61 = dma.vmem_to_smem %s59, 16, [#allocation6], [#allocation5]
    $region49: #{tpu_custom_call.1} parent=1 // pred_fallthru
      _
    // Predicated region
    $region50: #{tpu_custom_call.1} parent=1 // pred_check
      _
    $region51: #{tpu_custom_call.1} parent=1 // pred_check_branch
      %63 = sbr.rel (0) target = $region53
    $region52: #{tpu_custom_call.1} parent=1 // pred_region
      %64 = dma.done [#allocation3], 128
    $region53: #{tpu_custom_call.1} parent=1 // pred_fallthru
      _
    // Predicated region
    $region54: #{tpu_custom_call.1} parent=1 // pred_check
      _
    $region55: #{tpu_custom_call.1} parent=1 // pred_check_branch
      %66 = sbr.rel (0) target = $region57
    $region56: #{tpu_custom_call.1} parent=1 // pred_region
      %67 = dma.done [#allocation5], 16
    $region57: #{tpu_custom_call.1} parent=1 // pred_fallthru
      _
    %68 = sfence
    %v70 = vld [vmem:[#allocation2] sm:$0xf]
    %v71 = vld [vmem:[#allocation2 + $0x4] sm:$0xf]
    %v72 = vld [vmem:[%s2] sm:$0xf]
    %v73 = vld [vmem:[%s2 + $0x4] sm:$0xf]
    %v74 = vld [vmem:[%s2 + $0x8] sm:$0xf]
    %v75 = vld [vmem:[%s2 + $0xc] sm:$0xf]
    %v76 = vld [vmem:[%s3] sm:$0x1]
    %v78 = vlaneseq
    %v79 = vshrl.u32 %v78, 7
    %v80 = vsub.s32 0, %v79
    %v81 = vrot.slane %v76, %v80
    %v85 = vunpack.c.l.b16 %v70
    %v86 = vunpack.c.l.b16 %v71
    %v87 = vpack.c.b16 %v86, %v85
    %v92 = vunpack.c.l.b16 %v72
    %v93 = vunpack.c.l.b16 %v73
    %v94 = vunpack.c.l.b16 %v74
    %v95 = vunpack.c.l.b16 %v75
    %v96 = vpack.c.b16 %v93, %v92
    %v97 = vpack.c.b16 %v95, %v94
    %vm100 = vcmask 261120
    %v102 = vsel %vm100, %v87, 0
    %104 = vmatprep.subr.bf16.mxu0 0
    %105 = vmatpush1.bf16.msra.mxu0 %v96
    %106 = vmatprep.subr.bf16.mxu0 0
    %107 = vmatpush1.bf16.msra.mxu0 %v97
    %108 = vmatprep.subr.bf16.mxu0 0
    %109 = vmatpush1.bf16.msra.mxu0 0
    %110 = vmatprep.subr.bf16.mxu0 0
    %111 = vmatpush1.bf16.msra.mxu0 0
    %112 = vmatprep.subr.bf16.mxu0 0
    %113 = vmatpush1.bf16.msra.mxu0 0
    %114 = vmatprep.subr.bf16.mxu0 0
    %115 = vmatpush1.bf16.msra.mxu0 0
    %116 = vmatprep.subr.bf16.mxu0 0
    %117 = vmatpush1.bf16.msra.mxu0 0
    %118 = vmatprep.subr.bf16.mxu0 0
    %119 = vmatpush1.bf16.msra.mxu0 0
    %120 = vmatprep.subr.bf16.mxu0 0
    %121 = vmatpush1.bf16.msra.mxu0 0
    %122 = vmatprep.subr.bf16.mxu0 0
    %123 = vmatpush1.bf16.msra.mxu0 0
    %124 = vmatprep.subr.bf16.mxu0 0
    %125 = vmatpush1.bf16.msra.mxu0 0
    %126 = vmatprep.subr.bf16.mxu0 0
    %127 = vmatpush1.bf16.msra.mxu0 0
    %128 = vmatprep.subr.bf16.mxu0 0
    %129 = vmatpush1.bf16.msra.mxu0 0
    %130 = vmatprep.subr.bf16.mxu0 0
    %131 = vmatpush1.bf16.msra.mxu0 0
    %132 = vmatprep.subr.bf16.mxu0 0
    %133 = vmatpush1.bf16.msra.mxu0 0
    %134 = vmatprep.subr.bf16.mxu0 0
    %135 = vmatpush1.bf16.msra.mxu0 0
    %136 = vmatprep.mubr.bf16.mxu0 0
    %137 = vmatmul.mubr.bf16.gmra.mrb[0].mxu0 %v102
    %v138 = vpop.f32.mrb[0].mxu0
    %v139 = vadd.f32 %v81, %v138
    %v140 = vpop.f32.mrb[0].mxu0
    %v141 = vpop.f32.mrb[0].mxu0
    %v142 = vadd.f32 %v81, %v141
    %v143 = vpop.f32.mrb[0].mxu0
    %144 = vdwg.mxu0
    %v145 = vmax.f32 %v139, 0.0
    %v146 = vmax.f32 %v142, 0.0
    %v147 = vpack.c.bf16 %v146, %v145
    %v148 = vld [vmem:[%s4] sm:$0xf]
    %v149 = vld [vmem:[%s4 + $0x4] sm:$0xf]
    %v150 = vld [vmem:[%s4 + $0x8] sm:$0xf]
    %v151 = vld [vmem:[%s4 + $0xc] sm:$0xf]
    %v152 = vld [vmem:[%s5] sm:$0x1]
    %v154 = vlaneseq
    %v155 = vshrl.u32 %v154, 7
    %v156 = vsub.s32 0, %v155
    %v157 = vrot.slane %v152, %v156
    %v163 = vunpack.c.l.b16 %v148
    %v164 = vunpack.c.l.b16 %v149
    %v165 = vunpack.c.l.b16 %v150
    %v166 = vunpack.c.l.b16 %v151
    %v167 = vpack.c.b16 %v164, %v163
    %v168 = vpack.c.b16 %v166, %v165
    %v172 = vsel %vm100, %v147, 0
    %174 = vmatprep.subr.bf16.mxu0 0
    %175 = vmatpush1.bf16.msra.mxu0 %v167
    %176 = vmatprep.subr.bf16.mxu0 0
    %177 = vmatpush1.bf16.msra.mxu0 %v168
    %178 = vmatprep.subr.bf16.mxu0 0
    %179 = vmatpush1.bf16.msra.mxu0 0
    %180 = vmatprep.subr.bf16.mxu0 0
    %181 = vmatpush1.bf16.msra.mxu0 0
    %182 = vmatprep.subr.bf16.mxu0 0
    %183 = vmatpush1.bf16.msra.mxu0 0
    %184 = vmatprep.subr.bf16.mxu0 0
    %185 = vmatpush1.bf16.msra.mxu0 0
    %186 = vmatprep.subr.bf16.mxu0 0
    %187 = vmatpush1.bf16.msra.mxu0 0
    %188 = vmatprep.subr.bf16.mxu0 0
    %189 = vmatpush1.bf16.msra.mxu0 0
    %190 = vmatprep.subr.bf16.mxu0 0
    %191 = vmatpush1.bf16.msra.mxu0 0
    %192 = vmatprep.subr.bf16.mxu0 0
    %193 = vmatpush1.bf16.msra.mxu0 0
    %194 = vmatprep.subr.bf16.mxu0 0
    %195 = vmatpush1.bf16.msra.mxu0 0
    %196 = vmatprep.subr.bf16.mxu0 0
    %197 = vmatpush1.bf16.msra.mxu0 0
    %198 = vmatprep.subr.bf16.mxu0 0
    %199 = vmatpush1.bf16.msra.mxu0 0
    %200 = vmatprep.subr.bf16.mxu0 0
    %201 = vmatpush1.bf16.msra.mxu0 0
    %202 = vmatprep.subr.bf16.mxu0 0
    %203 = vmatpush1.bf16.msra.mxu0 0
    %204 = vmatprep.subr.bf16.mxu0 0
    %205 = vmatpush1.bf16.msra.mxu0 0
    %206 = vmatprep.mubr.bf16.mxu0 0
    %207 = vmatmul.mubr.bf16.gmra.mrb[0].mxu0 %v172
    %v208 = vpop.f32.mrb[0].mxu0
    %v209 = vadd.f32 %v157, %v208
    %v210 = vpop.f32.mrb[0].mxu0
    %v211 = vpop.f32.mrb[0].mxu0
    %v212 = vadd.f32 %v157, %v211
    %v213 = vpop.f32.mrb[0].mxu0
    %214 = vdwg.mxu0
    %vm215 = vcmask 31744
    %v216 = vsel %vm215, %v209, -inf
    %217 = vmax.xlane.f32.xlu0 %v216
    %v218 = vpop.xlane.xlu0 %217
    %v219 = vsel %vm215, %v212, -inf
    %220 = vmax.xlane.f32.xlu0 %v219
    %v221 = vpop.xlane.xlu0 %220
    %v222 = vsub.f32 %v209, %v218
    %v223 = vsub.f32 %v212, %v221
    %v224 = vmul.f32 %v222, 1.442695
    %v225 = vpow.pop %v224
    %v226 = vmul.f32 %v223, 1.442695
    %v227 = vpow.pop %v226
    %v228 = vsel %vm215, %v225, 0.0
    %229 = vadd.xlane.f32.xlu0 %v228
    %v230 = vpop.xlane.xlu0 %229
    %v231 = vsel %vm215, %v227, 0.0
    %232 = vadd.xlane.f32.xlu0 %v231
    %v233 = vpop.xlane.xlu0 %232
    %v234 = vrcp.pop %v230
    %v235 = vmul.f32 %v225, %v234
    %v236 = vrcp.pop %v233
    %v237 = vmul.f32 %v227, %v236
    %v238 = vld [vmem:[%s1] sm:$0xff]
    %v239 = vld [vmem:[%s1 + $0x8] sm:$0xff]
    %v240 = vld [vmem:[%s6] sm:$0x1]
    %v242 = vlaneseq
    %v243 = vshrl.u32 %v242, 7
    %v244 = vsub.s32 0, %v243
    %v245 = vrot.slane %v240, %v244
    %v247 = vmul.f32 %v238, %v245
    %v248 = vmul.f32 %v239, %v245
    %v249 = vadd.f32 %v235, %v247
    %v250 = vadd.f32 %v237, %v248
    %v251 = vmul.f32 %v238, %v238
    %v252 = vmul.f32 %v239, %v239
    %v253 = vsel %vm215, %v251, 0.0
    %254 = vadd.xlane.f32.xlu0 %v253
    %v255 = vpop.xlane.xlu0 %254
    %v256 = vsel %vm215, %v252, 0.0
    %257 = vadd.xlane.f32.xlu0 %v256
    %v258 = vpop.xlane.xlu0 %257
    %v259 = vmul.f32 %v255, -0.5
    %v260 = vmul.f32 %v258, -0.5
    %s261 = sld [smem:[#allocation6 + $0x1]]
    %v262 = vstv %s261
    %v263 = vadd.f32 %v259, %v262
    %v264 = vadd.f32 %v260, %v262
    %v265 = vld [vmem:[%s7] sm:$0x1]
    %267 = vset.pattern.permute.xlu0 0
    %268 = vperm.xlu0 %267, %v249
    %v269 = vpop.permute.xlu0 %268
    %272 = vset.pattern.permute.xlu0 0
    %273 = vperm.xlu0 %272, %v250
    %v274 = vpop.permute.xlu0 %273
    %v276 = vlaneseq
    %v277 = vshrl.u32 %v276, 7
    %v278 = vsub.s32 0, %v277
    %v279 = vrot.slane %v265, %v278
    %v280 = vmul.f32 %v269, %v279
    %v281 = vmul.f32 %v274, %v279
    %284 = vrot.lane.b32.xlu0 %v280, 32
    %v285 = vpop.permute.xlu0 %284
    %286 = vrot.lane.b32.xlu0 %v281, 32
    %v287 = vpop.permute.xlu0 %286
    %v290 = vadd.f32 %v139, %v285
    %v291 = vadd.f32 %v142, %v287
    %v292 = vld [vmem:[%s7 + $0x1] sm:$0x1]
    %293 = vset.pattern.permute.xlu0 1
    %294 = vperm.xlu0 %293, %v249
    %v295 = vpop.permute.xlu0 %294
    %297 = vset.pattern.permute.xlu0 1
    %298 = vperm.xlu0 %297, %v250
    %v299 = vpop.permute.xlu0 %298
    %v301 = vlaneseq
    %v302 = vshrl.u32 %v301, 7
    %v303 = vsub.s32 0, %v302
    %v304 = vrot.slane %v292, %v303
    %v305 = vmul.f32 %v295, %v304
    %v306 = vmul.f32 %v299, %v304
    %309 = vrot.lane.b32.xlu0 %v305, 32
    %v310 = vpop.permute.xlu0 %309
    %311 = vrot.lane.b32.xlu0 %v306, 32
    %v312 = vpop.permute.xlu0 %311
    %v315 = vadd.f32 %v290, %v310
    %v316 = vadd.f32 %v291, %v312
    %v317 = vld [vmem:[%s7 + $0x2] sm:$0x1]
    %318 = vset.pattern.permute.xlu0 2
    %319 = vperm.xlu0 %318, %v249
    %v320 = vpop.permute.xlu0 %319
    %322 = vset.pattern.permute.xlu0 2
    %323 = vperm.xlu0 %322, %v250
    %v324 = vpop.permute.xlu0 %323
    %v326 = vlaneseq
    %v327 = vshrl.u32 %v326, 7
    %v328 = vsub.s32 0, %v327
    %v329 = vrot.slane %v317, %v328
    %v330 = vmul.f32 %v320, %v329
    %v331 = vmul.f32 %v324, %v329
    %334 = vrot.lane.b32.xlu0 %v330, 32
    %v335 = vpop.permute.xlu0 %334
    %336 = vrot.lane.b32.xlu0 %v331, 32
    %v337 = vpop.permute.xlu0 %336
    %v340 = vadd.f32 %v315, %v335
    %v341 = vadd.f32 %v316, %v337
    %v342 = vld [vmem:[%s7 + $0x3] sm:$0x1]
    %343 = vset.pattern.permute.xlu0 3
    %344 = vperm.xlu0 %343, %v249
    %v345 = vpop.permute.xlu0 %344
    %347 = vset.pattern.permute.xlu0 3
    %348 = vperm.xlu0 %347, %v250
    %v349 = vpop.permute.xlu0 %348
    %v351 = vlaneseq
    %v352 = vshrl.u32 %v351, 7
    %v353 = vsub.s32 0, %v352
    %v354 = vrot.slane %v342, %v353
    %v355 = vmul.f32 %v345, %v354
    %v356 = vmul.f32 %v349, %v354
    %359 = vrot.lane.b32.xlu0 %v355, 32
    %v360 = vpop.permute.xlu0 %359
    %361 = vrot.lane.b32.xlu0 %v356, 32
    %v362 = vpop.permute.xlu0 %361
    %v365 = vadd.f32 %v340, %v360
    %v366 = vadd.f32 %v341, %v362
    %v367 = vmax.f32 %v365, 0.0
    %v368 = vmax.f32 %v366, 0.0
    %v369 = vpack.c.bf16 %v368, %v367
    %v370 = vld [vmem:[%s8] sm:$0xf]
    %v371 = vld [vmem:[%s8 + $0x4] sm:$0xf]
    %v372 = vld [vmem:[%s8 + $0x8] sm:$0xf]
    %v373 = vld [vmem:[%s8 + $0xc] sm:$0xf]
    %v374 = vld [vmem:[%s9] sm:$0x1]
    %v376 = vlaneseq
    %v377 = vshrl.u32 %v376, 7
    %v378 = vsub.s32 0, %v377
    %v379 = vrot.slane %v374, %v378
    %382 = vrot.lane.b32.xlu0 %v369, 96
    %v383 = vpop.permute.xlu0 %382
    %v388 = vunpack.c.l.b16 %v370
    %v389 = vunpack.c.l.b16 %v371
    %v390 = vunpack.c.l.b16 %v372
    %v391 = vunpack.c.l.b16 %v373
    %v392 = vpack.c.b16 %v389, %v388
    %v393 = vpack.c.b16 %v391, %v390
    %v397 = vsel %vm100, %v383, 0
    %399 = vmatprep.subr.bf16.mxu0 0
    %400 = vmatpush1.bf16.msra.mxu0 %v392
    %401 = vmatprep.subr.bf16.mxu0 0
    %402 = vmatpush1.bf16.msra.mxu0 %v393
    %403 = vmatprep.subr.bf16.mxu0 0
    %404 = vmatpush1.bf16.msra.mxu0 0
    %405 = vmatprep.subr.bf16.mxu0 0
    %406 = vmatpush1.bf16.msra.mxu0 0
    %407 = vmatprep.subr.bf16.mxu0 0
    %408 = vmatpush1.bf16.msra.mxu0 0
    %409 = vmatprep.subr.bf16.mxu0 0
    %410 = vmatpush1.bf16.msra.mxu0 0
    %411 = vmatprep.subr.bf16.mxu0 0
    %412 = vmatpush1.bf16.msra.mxu0 0
    %413 = vmatprep.subr.bf16.mxu0 0
    %414 = vmatpush1.bf16.msra.mxu0 0
    %415 = vmatprep.subr.bf16.mxu0 0
    %416 = vmatpush1.bf16.msra.mxu0 0
    %417 = vmatprep.subr.bf16.mxu0 0
    %418 = vmatpush1.bf16.msra.mxu0 0
    %419 = vmatprep.subr.bf16.mxu0 0
    %420 = vmatpush1.bf16.msra.mxu0 0
    %421 = vmatprep.subr.bf16.mxu0 0
    %422 = vmatpush1.bf16.msra.mxu0 0
    %423 = vmatprep.subr.bf16.mxu0 0
    %424 = vmatpush1.bf16.msra.mxu0 0
    %425 = vmatprep.subr.bf16.mxu0 0
    %426 = vmatpush1.bf16.msra.mxu0 0
    %427 = vmatprep.subr.bf16.mxu0 0
    %428 = vmatpush1.bf16.msra.mxu0 0
    %429 = vmatprep.subr.bf16.mxu0 0
    %430 = vmatpush1.bf16.msra.mxu0 0
    %431 = vmatprep.mubr.bf16.mxu0 0
    %432 = vmatmul.mubr.bf16.gmra.mrb[0].mxu0 %v397
    %v433 = vpop.f32.mrb[0].mxu0
    %v434 = vadd.f32 %v379, %v433
    %v435 = vpop.f32.mrb[0].mxu0
    %v436 = vpop.f32.mrb[0].mxu0
    %v437 = vadd.f32 %v379, %v436
    %v438 = vpop.f32.mrb[0].mxu0
    %439 = vdwg.mxu0
    %v440 = vmax.f32 %v434, 0.0
    %v441 = vmax.f32 %v437, 0.0
    %v442 = vld [vmem:[%s10] sm:$0x1]
    %v444 = vlaneseq
    %v445 = vshrl.u32 %v444, 7
    %v446 = vsub.s32 0, %v445
    %v447 = vrot.slane %v442, %v446
    %v449 = vmul.f32 %v440, %v447
    %v450 = vmul.f32 %v441, %v447
    %v451 = vsel %vm100, %v449, 0.0
    %452 = vadd.xlane.f32.xlu0 %v451
    %v453 = vpop.xlane.xlu0 %452
    %v454 = vsel %vm100, %v450, 0.0
    %455 = vadd.xlane.f32.xlu0 %v454
    %v456 = vpop.xlane.xlu0 %455
    %s457 = sld [smem:[#allocation6]]
    %v458 = vstv %s457
    %v459 = vadd.f32 %v453, %v458
    %v460 = vadd.f32 %v456, %v458
    %463 = vrot.lane.b32.xlu0 %v235, 4
    %v464 = vpop.permute.xlu0 %463
    %465 = vrot.lane.b32.xlu0 %v237, 4
    %v466 = vpop.permute.xlu0 %465
    %v469 = vsel %vm215, %v249, %v464
    %v470 = vsel %vm215, %v250, %v466
    %vm471 = vcmask 64512
    %v472 = vsel %vm471, %v469, %v263
    %v473 = vsel %vm471, %v470, %v264
    %vm474 = vcmask 72704
    %v475 = vsel %vm474, %v472, %v459
    %v476 = vsel %vm474, %v473, %v460
    %vm477 = vcmask 80896
    %478 = vst.msk [vmem:[#allocation7] sm:$0xff] %vm477, %v475
    %479 = vst.msk [vmem:[#allocation7 + $0x8] sm:$0xff] %vm477, %v476
    // Predicated region
    $region58: #{tpu_custom_call.1} parent=1 // pred_check
      _
    $region59: #{tpu_custom_call.1} parent=1 // pred_check_branch
      %481 = sbr.rel (0) target = $region61
    $region60: #{tpu_custom_call.1} parent=1 // pred_region
      %s483 = ssub.s32 256, 256
      %484 = vsyncadd [#allocation4], %s483
      %s485 = sshll.u32 [#allocation7], 4
      %s486 = int_to_ptr.vmem [resolvable:$true] %s485
      %491 = dma.vmem_to_hbm [thread:$0]  %s486, 256, %s12, [#allocation4], 128, 128, 8
    $region61: #{tpu_custom_call.1} parent=1 // pred_fallthru
      _
    // Predicated region
    $region62: #{tpu_custom_call.1} parent=1 // pred_check
      _
    $region63: #{tpu_custom_call.1} parent=1 // pred_check_branch
      %493 = sbr.rel (0) target = $region65
    $region64: #{tpu_custom_call.1} parent=1 // pred_region
      %494 = dma.done [#allocation4], 256
    $region65: #{tpu_custom_call.1} parent=1 // pred_fallthru
      _
    %495 = vsyncpa [#allocation3], 1
    %496 = vsyncpa [#allocation4], 1
    %497 = vsyncpa [#allocation5], 1

</llo_original>
